<compile_context>
chip_gen: v7x
topology: tpu7x:2x2x1
jax: 0.10.0
libtpu: 0.0.40
codegen_flags: <defaults>
</compile_context>

<pallas_src>
import jax
import jax.numpy as jnp
from jax.experimental import pallas as pl
from jax.experimental.pallas import tpu as pltpu

# fc1..fc6 at chained widths (fc5/fc6 real widths preserved).
LAYER_DIMS = [(192, 160), (160, 128), (128, 96), (96, 64), (64, 10), (10, 2)]
N_LAYERS = len(LAYER_DIMS)
N_CLASSES = LAYER_DIMS[-1][1]          # 2
IN_FEAT = LAYER_DIMS[0][0]             # 192 = C*H*W
WIDE = 256                             # padded width of fc1 output (160 -> 256)
NARROW = 128                           # padded width of fc2..fc6 outputs
NEG_BIG = -1e30                        # finite "-inf" baked into fc6 bias pad
DROPOUT_P = 0.4
# TODO(synk): dropout(p=0.4) is applied as eval-mode identity; torch
# training-mode dropout RNG cannot be bit-matched inside a Pallas kernel.


def _mlp_kernel(x_ref, w0_ref, w1_ref, wr_ref, b_ref, out_ref):
    """Fused MLP forward: 6 matmuls + ReLU + final log_softmax, all in VMEM.

    x_ref:   (B, 192)          f32  flattened activations (no padding)
    w0_ref:  (192, 256)        bf16 fc1 weight, (in, out), out zero-padded
    w1_ref:  (256, 128)        bf16 fc2 weight, (in, out), zero-padded
    wr_ref:  (4, 128, 128)     bf16 fc3..fc6 weights, (in, out), zero-padded
    b_ref:   (6, 1, 256)       f32  biases; fc6 pad lanes pre-set to NEG_BIG
    out_ref: (B, 2)            f32  log-probs
    """
    # fc1: (B,192) @ (192,256) + b, ReLU, dropout(identity)
    h = jnp.dot(x_ref[...].astype(jnp.bfloat16), w0_ref[...],
                preferred_element_type=jnp.float32) + b_ref[0]
    h = jnp.maximum(h, 0.0)

    # fc2: (B,256) @ (256,128) + b, ReLU, dropout(identity)
    h = jnp.dot(h.astype(jnp.bfloat16), w1_ref[...],
                preferred_element_type=jnp.float32) + b_ref[1][:, :NARROW]
    h = jnp.maximum(h, 0.0)

    # fc3..fc6: (B,128) @ (128,128); ReLU on all but the last (fc6)
    for i in range(4):                                   # static unrolled loop
        h = jnp.dot(h.astype(jnp.bfloat16), wr_ref[i],
                    preferred_element_type=jnp.float32) + b_ref[2 + i][:, :NARROW]
        if i < 3:
            h = jnp.maximum(h, 0.0)                      # F.relu (f32 VPU)
            # dropout(p=0.4): identity in eval mode (see TODO above)

    # fc6 padded lanes arrive at NEG_BIG straight out of the bias add (mask
    # was baked in at init), so log_softmax needs no iota/where here.
    m = jnp.max(h, axis=-1, keepdims=True)
    s = h - m
    lse = jnp.log(jnp.sum(jnp.exp(s), axis=-1, keepdims=True))
    out_ref[...] = (s - lse)[:, :N_CLASSES].astype(out_ref.dtype)


@jax.jit
def network_forward(x, w0, w1, wr, b_slab):
    b_sz = x.shape[0]
    x_flat = x.reshape(b_sz, -1).astype(jnp.float32)     # x.view(x.shape[0], -1)
    assert x_flat.shape[1] == IN_FEAT, x_flat.shape

    out = pl.pallas_call(
        _mlp_kernel,
        out_shape=jax.ShapeDtypeStruct((b_sz, N_CLASSES), jnp.float32),
        in_specs=[pl.BlockSpec(memory_space=pltpu.MemorySpace.VMEM)] * 5,
        out_specs=pl.BlockSpec(memory_space=pltpu.MemorySpace.VMEM),
    )(x_flat, w0, w1, wr, b_slab)
    # TODO(synk): if batch grows to a few hundred+ rows, add a 1-D "parallel"
    # grid over the batch axis (weights resident via constant index_map,
    # activations streamed in >=512-row tiles) so v7x can shard across its
    # 2 TensorCores; size tiles against v7x's 64 MiB VMEM, not 128 MiB.
    return out


def init_params(key):
    """Torch nn.Linear default init U(-1/sqrt(fan_in), 1/sqrt(fan_in)),
    pre-transposed to (in, out) and packed ONCE into tight padded slabs:
      w0 (192,256) bf16, w1 (256,128) bf16, wr (4,128,128) bf16,
      biases (6,1,256) f32 with the fc6 padding lanes pre-set to NEG_BIG."""
    w0 = jnp.zeros((IN_FEAT, WIDE), jnp.bfloat16)
    w1 = jnp.zeros((WIDE, NARROW), jnp.bfloat16)
    wr = jnp.zeros((4, NARROW, NARROW), jnp.bfloat16)
    b_slab = jnp.zeros((N_LAYERS, 1, WIDE), jnp.float32)
    for i, (fan_in, fan_out) in enumerate(LAYER_DIMS):
        key, kw, kb = jax.random.split(key, 3)
        bound = 1.0 / (fan_in ** 0.5)
        w = jax.random.uniform(kw, (fan_out, fan_in), jnp.float32, -bound, bound)
        bias = jax.random.uniform(kb, (fan_out,), jnp.float32, -bound, bound)
        wt = w.T.astype(jnp.bfloat16)                    # (in, out)
        if i == 0:
            w0 = w0.at[:fan_in, :fan_out].set(wt)
        elif i == 1:
            w1 = w1.at[:fan_in, :fan_out].set(wt)
        else:
            wr = wr.at[i - 2, :fan_in, :fan_out].set(wt)
        b_slab = b_slab.at[i, 0, :fan_out].set(bias)
    # Bake the log_softmax lane mask into fc6's bias (padded weight columns
    # are zero, so padded logits = 0 + NEG_BIG). Kept in f32 on purpose.
    b_slab = b_slab.at[N_LAYERS - 1, 0, N_CLASSES:].set(NEG_BIG)
    return w0, w1, wr, b_slab


if __name__ == "__main__":
    key = jax.random.PRNGKey(0)
    kx, kp = jax.random.split(key)

    # NCHW input: [batch=2, channels=3, H=8, W=8] -> flattens to 192 features.
    x = jax.random.normal(kx, (2, 3, 8, 8), dtype=jnp.float32)
    w0, w1, wr, b_slab = init_params(kp)

    out = network_forward(x, w0, w1, wr, b_slab)
    jax.block_until_ready(out)

    assert out.shape == (2, N_CLASSES), out.shape
    assert bool(jnp.all(jnp.isfinite(out)))
    # rows of log_softmax output must exp-sum to ~1
    assert jnp.allclose(jnp.sum(jnp.exp(out), axis=1), 1.0, atol=1e-3)
    print("KERNEL_OK")
</pallas_src>

<mosaic_0001>
module attributes {stable_mosaic.version = 11 : i64} {
  func.func @_mlp_kernel(%arg0: memref<2x192xf32, #tpu.memory_space<vmem>>, %arg1: memref<192x256xbf16, #tpu.memory_space<vmem>>, %arg2: memref<256x128xbf16, #tpu.memory_space<vmem>>, %arg3: memref<4x128x128xbf16, #tpu.memory_space<vmem>>, %arg4: memref<6x1x256xf32, #tpu.memory_space<vmem>>, %arg5: memref<2x2xf32, #tpu.memory_space<vmem>>) attributes {dimension_semantics = [], scalar_prefetch = 0 : i64, scratch_operands = 0 : i64, tpu.core_type = #tpu.core_type<tc>} {
    %c0 = arith.constant 0 : index
    %c0_0 = arith.constant 0 : index
    %0 = vector.load %arg0[%c0, %c0_0] : memref<2x192xf32, #tpu.memory_space<vmem>>, vector<2x192xf32>
    %1 = arith.truncf %0 : vector<2x192xf32> to vector<2x192xbf16>
    %c0_1 = arith.constant 0 : index
    %c0_2 = arith.constant 0 : index
    %2 = vector.load %arg1[%c0_1, %c0_2] : memref<192x256xbf16, #tpu.memory_space<vmem>>, vector<192x256xbf16>
    %cst = arith.constant dense<0.000000e+00> : vector<2x256xf32>
    %3 = tpu.matmul %1, %2, %cst {dimension_numbers = #tpu.dot_dimension_numbers<[1], [0], [0], [1], [0, 0, 1, 1], [], []>} : vector<2x192xbf16>, vector<192x256xbf16>, vector<2x256xf32> -> vector<2x256xf32>
    %c0_3 = arith.constant 0 : index
    %c0_4 = arith.constant 0 : index
    %c0_5 = arith.constant 0 : index
    %4 = vector.load %arg4[%c0_3, %c0_4, %c0_5] : memref<6x1x256xf32, #tpu.memory_space<vmem>>, vector<1x1x256xf32>
    %5 = vector.shape_cast %4 : vector<1x1x256xf32> to vector<1x256xf32>
    %6 = vector.broadcast %5 : vector<1x256xf32> to vector<2x256xf32>
    %7 = arith.addf %3, %6 : vector<2x256xf32>
    %cst_6 = arith.constant 0.000000e+00 : f32
    %8 = vector.broadcast %cst_6 : f32 to vector<2x256xf32>
    %9 = arith.maximumf %7, %8 : vector<2x256xf32>
    %10 = arith.truncf %9 : vector<2x256xf32> to vector<2x256xbf16>
    %c0_7 = arith.constant 0 : index
    %c0_8 = arith.constant 0 : index
    %11 = vector.load %arg2[%c0_7, %c0_8] : memref<256x128xbf16, #tpu.memory_space<vmem>>, vector<256x128xbf16>
    %cst_9 = arith.constant dense<0.000000e+00> : vector<2x128xf32>
    %12 = tpu.matmul %10, %11, %cst_9 {dimension_numbers = #tpu.dot_dimension_numbers<[1], [0], [0], [1], [0, 0, 1, 1], [], []>} : vector<2x256xbf16>, vector<256x128xbf16>, vector<2x128xf32> -> vector<2x128xf32>
    %c1 = arith.constant 1 : index
    %c0_10 = arith.constant 0 : index
    %c0_11 = arith.constant 0 : index
    %13 = vector.load %arg4[%c1, %c0_10, %c0_11] : memref<6x1x256xf32, #tpu.memory_space<vmem>>, vector<1x1x256xf32>
    %14 = vector.shape_cast %13 : vector<1x1x256xf32> to vector<1x256xf32>
    %15 = vector.extract_strided_slice %14 {offsets = [0, 0], sizes = [1, 128], strides = [1, 1]} : vector<1x256xf32> to vector<1x128xf32>
    %16 = vector.broadcast %15 : vector<1x128xf32> to vector<2x128xf32>
    %17 = arith.addf %12, %16 : vector<2x128xf32>
    %cst_12 = arith.constant 0.000000e+00 : f32
    %18 = vector.broadcast %cst_12 : f32 to vector<2x128xf32>
    %19 = arith.maximumf %17, %18 : vector<2x128xf32>
    %20 = arith.truncf %19 : vector<2x128xf32> to vector<2x128xbf16>
    %c0_13 = arith.constant 0 : index
    %c0_14 = arith.constant 0 : index
    %c0_15 = arith.constant 0 : index
    %21 = vector.load %arg3[%c0_13, %c0_14, %c0_15] : memref<4x128x128xbf16, #tpu.memory_space<vmem>>, vector<1x128x128xbf16>
    %22 = vector.shape_cast %21 : vector<1x128x128xbf16> to vector<128x128xbf16>
    %cst_16 = arith.constant dense<0.000000e+00> : vector<2x128xf32>
    %23 = tpu.matmul %20, %22, %cst_16 {dimension_numbers = #tpu.dot_dimension_numbers<[1], [0], [0], [1], [0, 0, 1, 1], [], []>} : vector<2x128xbf16>, vector<128x128xbf16>, vector<2x128xf32> -> vector<2x128xf32>
    %c2 = arith.constant 2 : index
    %c0_17 = arith.constant 0 : index
    %c0_18 = arith.constant 0 : index
    %24 = vector.load %arg4[%c2, %c0_17, %c0_18] : memref<6x1x256xf32, #tpu.memory_space<vmem>>, vector<1x1x256xf32>
    %25 = vector.shape_cast %24 : vector<1x1x256xf32> to vector<1x256xf32>
    %26 = vector.extract_strided_slice %25 {offsets = [0, 0], sizes = [1, 128], strides = [1, 1]} : vector<1x256xf32> to vector<1x128xf32>
    %27 = vector.broadcast %26 : vector<1x128xf32> to vector<2x128xf32>
    %28 = arith.addf %23, %27 : vector<2x128xf32>
    %cst_19 = arith.constant 0.000000e+00 : f32
    %29 = vector.broadcast %cst_19 : f32 to vector<2x128xf32>
    %30 = arith.maximumf %28, %29 : vector<2x128xf32>
    %31 = arith.truncf %30 : vector<2x128xf32> to vector<2x128xbf16>
    %c1_20 = arith.constant 1 : index
    %c0_21 = arith.constant 0 : index
    %c0_22 = arith.constant 0 : index
    %32 = vector.load %arg3[%c1_20, %c0_21, %c0_22] : memref<4x128x128xbf16, #tpu.memory_space<vmem>>, vector<1x128x128xbf16>
    %33 = vector.shape_cast %32 : vector<1x128x128xbf16> to vector<128x128xbf16>
    %cst_23 = arith.constant dense<0.000000e+00> : vector<2x128xf32>
    %34 = tpu.matmul %31, %33, %cst_23 {dimension_numbers = #tpu.dot_dimension_numbers<[1], [0], [0], [1], [0, 0, 1, 1], [], []>} : vector<2x128xbf16>, vector<128x128xbf16>, vector<2x128xf32> -> vector<2x128xf32>
    %c3 = arith.constant 3 : index
    %c0_24 = arith.constant 0 : index
    %c0_25 = arith.constant 0 : index
    %35 = vector.load %arg4[%c3, %c0_24, %c0_25] : memref<6x1x256xf32, #tpu.memory_space<vmem>>, vector<1x1x256xf32>
    %36 = vector.shape_cast %35 : vector<1x1x256xf32> to vector<1x256xf32>
    %37 = vector.extract_strided_slice %36 {offsets = [0, 0], sizes = [1, 128], strides = [1, 1]} : vector<1x256xf32> to vector<1x128xf32>
    %38 = vector.broadcast %37 : vector<1x128xf32> to vector<2x128xf32>
    %39 = arith.addf %34, %38 : vector<2x128xf32>
    %cst_26 = arith.constant 0.000000e+00 : f32
    %40 = vector.broadcast %cst_26 : f32 to vector<2x128xf32>
    %41 = arith.maximumf %39, %40 : vector<2x128xf32>
    %42 = arith.truncf %41 : vector<2x128xf32> to vector<2x128xbf16>
    %c2_27 = arith.constant 2 : index
    %c0_28 = arith.constant 0 : index
    %c0_29 = arith.constant 0 : index
    %43 = vector.load %arg3[%c2_27, %c0_28, %c0_29] : memref<4x128x128xbf16, #tpu.memory_space<vmem>>, vector<1x128x128xbf16>
    %44 = vector.shape_cast %43 : vector<1x128x128xbf16> to vector<128x128xbf16>
    %cst_30 = arith.constant dense<0.000000e+00> : vector<2x128xf32>
    %45 = tpu.matmul %42, %44, %cst_30 {dimension_numbers = #tpu.dot_dimension_numbers<[1], [0], [0], [1], [0, 0, 1, 1], [], []>} : vector<2x128xbf16>, vector<128x128xbf16>, vector<2x128xf32> -> vector<2x128xf32>
    %c4 = arith.constant 4 : index
    %c0_31 = arith.constant 0 : index
    %c0_32 = arith.constant 0 : index
    %46 = vector.load %arg4[%c4, %c0_31, %c0_32] : memref<6x1x256xf32, #tpu.memory_space<vmem>>, vector<1x1x256xf32>
    %47 = vector.shape_cast %46 : vector<1x1x256xf32> to vector<1x256xf32>
    %48 = vector.extract_strided_slice %47 {offsets = [0, 0], sizes = [1, 128], strides = [1, 1]} : vector<1x256xf32> to vector<1x128xf32>
    %49 = vector.broadcast %48 : vector<1x128xf32> to vector<2x128xf32>
    %50 = arith.addf %45, %49 : vector<2x128xf32>
    %cst_33 = arith.constant 0.000000e+00 : f32
    %51 = vector.broadcast %cst_33 : f32 to vector<2x128xf32>
    %52 = arith.maximumf %50, %51 : vector<2x128xf32>
    %53 = arith.truncf %52 : vector<2x128xf32> to vector<2x128xbf16>
    %c3_34 = arith.constant 3 : index
    %c0_35 = arith.constant 0 : index
    %c0_36 = arith.constant 0 : index
    %54 = vector.load %arg3[%c3_34, %c0_35, %c0_36] : memref<4x128x128xbf16, #tpu.memory_space<vmem>>, vector<1x128x128xbf16>
    %55 = vector.shape_cast %54 : vector<1x128x128xbf16> to vector<128x128xbf16>
    %cst_37 = arith.constant dense<0.000000e+00> : vector<2x128xf32>
    %56 = tpu.matmul %53, %55, %cst_37 {dimension_numbers = #tpu.dot_dimension_numbers<[1], [0], [0], [1], [0, 0, 1, 1], [], []>} : vector<2x128xbf16>, vector<128x128xbf16>, vector<2x128xf32> -> vector<2x128xf32>
    %c5 = arith.constant 5 : index
    %c0_38 = arith.constant 0 : index
    %c0_39 = arith.constant 0 : index
    %57 = vector.load %arg4[%c5, %c0_38, %c0_39] : memref<6x1x256xf32, #tpu.memory_space<vmem>>, vector<1x1x256xf32>
    %58 = vector.shape_cast %57 : vector<1x1x256xf32> to vector<1x256xf32>
    %59 = vector.extract_strided_slice %58 {offsets = [0, 0], sizes = [1, 128], strides = [1, 1]} : vector<1x256xf32> to vector<1x128xf32>
    %60 = vector.broadcast %59 : vector<1x128xf32> to vector<2x128xf32>
    %61 = arith.addf %56, %60 : vector<2x128xf32>
    %cst_40 = arith.constant dense<0xFF800000> : vector<2xf32>
    %62 = vector.multi_reduction <maximumf>, %61, %cst_40 [1] : vector<2x128xf32> to vector<2xf32>
    %63 = vector.shape_cast %62 : vector<2xf32> to vector<2x1xf32>
    %64 = vector.broadcast %63 : vector<2x1xf32> to vector<2x128xf32>
    %65 = arith.subf %61, %64 : vector<2x128xf32>
    %66 = math.exp %65 : vector<2x128xf32>
    %cst_41 = arith.constant dense<0.000000e+00> : vector<2xf32>
    %67 = vector.multi_reduction <add>, %66, %cst_41 [1] : vector<2x128xf32> to vector<2xf32>
    %68 = vector.shape_cast %67 : vector<2xf32> to vector<2x1xf32>
    %69 = math.log %68 : vector<2x1xf32>
    %70 = vector.broadcast %69 : vector<2x1xf32> to vector<2x128xf32>
    %71 = arith.subf %65, %70 : vector<2x128xf32>
    %72 = vector.extract_strided_slice %71 {offsets = [0, 0], sizes = [2, 2], strides = [1, 1]} : vector<2x128xf32> to vector<2x2xf32>
    %c0_42 = arith.constant 0 : index
    %c0_43 = arith.constant 0 : index
    %73 = vector.load %arg5[%c0_42, %c0_43] : memref<2x2xf32, #tpu.memory_space<vmem>>, vector<2x2xf32>
    tpu.vector_store %arg5[%c0_42, %c0_43], %72 {strides = array<i32>} : memref<2x2xf32, #tpu.memory_space<vmem>>, vector<2x2xf32>,
    return
  }
}

</mosaic_0001>

<llo_original>
// kernel: network_forward.1
$region0: #{network_forward.1}
  #allocation0 [shape = 'u32[]', space=smem, size = 0x4, offset = 0x4, fixed_abs, tag = 'smem constant byte address 0x4 - core index']
  #allocation1 [shape = 'u32[144,128]{1,0:T(1,128)}', space=vmem, size = 0x12000, scoped, tag = 'internal scratch']
  %s0 = inlined_call_operand.vmem [shape: f32[2,192], index: 0, kind: input, shape index: {}]
  %s1 = inlined_call_operand.hbm [shape: bf16[192,256], index: 1, kind: input, shape index: {}]
  %s2 = inlined_call_operand.hbm [shape: bf16[256,128], index: 2, kind: input, shape index: {}]
  %s3 = inlined_call_operand.hbm [shape: bf16[4,128,128], index: 3, kind: input, shape index: {}]
  %s4 = inlined_call_operand.vmem [shape: f32[6,1,256], index: 4, kind: input, shape index: {}]
  %s5 = inlined_call_operand.hbm [shape: f32[2,2], index: 5, kind: output, shape index: {}]
  %s6 = sld [smem:[#allocation0]]
  $region42: #{network_forward.1} parent=0
    _
  %s8 = ssub.s32 1, %s6
  %s9 = scalar_select 0, %s8, %s6
  $region1: #{network_forward.1} parent=0
    #allocation2 [shape = 'u8[98304]{0}', space=vmem, size = 0x18000, scoped, tag = 'input window, operand 1, single buffered']
    #allocation3 [shape = 's32[1]{0}', space=sflag, size = 0x4, scoped, tag = 'scoped memory for network_forward.1']
    #allocation4 [shape = 's32[1]{0}', space=sflag, size = 0x4, scoped, tag = 'scoped memory for network_forward.1']
    #allocation5 [shape = 'u8[65536]{0}', space=vmem, size = 0x10000, scoped, tag = 'input window, operand 2, single buffered']
    #allocation6 [shape = 's32[1]{0}', space=sflag, size = 0x4, scoped, tag = 'scoped memory for network_forward.1']
    #allocation7 [shape = 'u8[131072]{0}', space=vmem, size = 0x20000, scoped, tag = 'input window, operand 3, single buffered']
    #allocation8 [shape = 'u8[1024]{0}', space=vmem, size = 0x400, scoped, tag = 'output window, operand 0, single buffered']
    %10 = vsyncpa [#allocation3], 0
    %11 = vsyncpa [#allocation6], 0
    %12 = vsyncpa [#allocation4], 0
    // Predicated region
    $region2: #{network_forward.1} parent=1 // pred_check
      _
    $region3: #{network_forward.1} parent=1 // pred_check_branch
      %14 = sbr.rel (0) target = $region5
    $region4: #{network_forward.1} parent=1 // pred_region
      _
    $region5: #{network_forward.1} parent=1 // pred_fallthru
      _
    // Predicated region
    $region6: #{network_forward.1} parent=1 // pred_check
      _
    $region7: #{network_forward.1} parent=1 // pred_check_branch
      %16 = sbr.rel (0) target = $region9
    $region8: #{network_forward.1} parent=1 // pred_region
      %s18 = ssub.s32 3072, 3072
      %19 = vsyncadd [#allocation3], %s18
      %s20 = sshll.u32 [#allocation2], 4
      %s21 = int_to_ptr.vmem [resolvable:$true] %s20
      %26 = dma.hbm_to_vmem [thread:$0]  %s1, 3072, %s21, [#allocation3], 128, 128, 8
    $region9: #{network_forward.1} parent=1 // pred_fallthru
      _
    // Predicated region
    $region10: #{network_forward.1} parent=1 // pred_check
      _
    $region11: #{network_forward.1} parent=1 // pred_check_branch
      %28 = sbr.rel (0) target = $region13
    $region12: #{network_forward.1} parent=1 // pred_region
      %s30 = ssub.s32 2048, 2048
      %31 = vsyncadd [#allocation6], %s30
      %s32 = sshll.u32 [#allocation5], 4
      %s33 = int_to_ptr.vmem [resolvable:$true] %s32
      %38 = dma.hbm_to_vmem [thread:$0]  %s2, 2048, %s33, [#allocation6], 64, 64, 4
    $region13: #{network_forward.1} parent=1 // pred_fallthru
      _
    // Predicated region
    $region14: #{network_forward.1} parent=1 // pred_check
      _
    $region15: #{network_forward.1} parent=1 // pred_check_branch
      %40 = sbr.rel (0) target = $region17
    $region16: #{network_forward.1} parent=1 // pred_region
      %s42 = ssub.s32 4096, 4096
      %43 = vsyncadd [#allocation6], %s42
      %s44 = sshll.u32 [#allocation7], 4
      %s45 = int_to_ptr.vmem [resolvable:$true] %s44
      %50 = dma.hbm_to_vmem [thread:$0]  %s3, 4096, %s45, [#allocation6], 64, 64, 4
    $region17: #{network_forward.1} parent=1 // pred_fallthru
      _
    // Predicated region
    $region18: #{network_forward.1} parent=1 // pred_check
      _
    $region19: #{network_forward.1} parent=1 // pred_check_branch
      %52 = sbr.rel (0) target = $region21
    $region20: #{network_forward.1} parent=1 // pred_region
      _
    $region21: #{network_forward.1} parent=1 // pred_fallthru
      _
    // Predicated region
    $region22: #{network_forward.1} parent=1 // pred_check
      _
    $region23: #{network_forward.1} parent=1 // pred_check_branch
      %54 = sbr.rel (0) target = $region25
    $region24: #{network_forward.1} parent=1 // pred_region
      %55 = dma.done [#allocation3], 3072
    $region25: #{network_forward.1} parent=1 // pred_fallthru
      _
    // Predicated region
    $region26: #{network_forward.1} parent=1 // pred_check
      _
    $region27: #{network_forward.1} parent=1 // pred_check_branch
      %57 = sbr.rel (0) target = $region29
    $region28: #{network_forward.1} parent=1 // pred_region
      %58 = dma.done [#allocation6], 2048
    $region29: #{network_forward.1} parent=1 // pred_fallthru
      _
    // Predicated region
    $region30: #{network_forward.1} parent=1 // pred_check
      _
    $region31: #{network_forward.1} parent=1 // pred_check_branch
      %60 = sbr.rel (0) target = $region33
    $region32: #{network_forward.1} parent=1 // pred_region
      %61 = dma.done [#allocation6], 4096
    $region33: #{network_forward.1} parent=1 // pred_fallthru
      _
    %v63 = vld [vmem:[%s0] sm:$0xf]
    %v66 = vunpack.c.l.s4 1983009808
    %v67 = vunpack.c.0.s8 %v66
    %v68 = vlaneseq
    %v69 = vshrl.u32 %v68, 7
    %v70 = vsub.s32 %v67, %v69
    %v71 = vrot.slane %v63, %v70
    %v72 = vcombine.high %v71, %v71
    %v75 = vpack.c.bf16 %v71, %v71
    %v76 = vpack.c.bf16 %v72, %v72
    %v77 = vld [vmem:[#allocation2] sm:$0xff]
    %v78 = vld [vmem:[#allocation2 + $0x8] sm:$0xff]
    %v79 = vld [vmem:[#allocation2 + $0x10] sm:$0xff]
    %v80 = vld [vmem:[#allocation2 + $0x18] sm:$0xff]
    %v81 = vld [vmem:[#allocation2 + $0x20] sm:$0xff]
    %v82 = vld [vmem:[#allocation2 + $0x28] sm:$0xff]
    %v83 = vld [vmem:[#allocation2 + $0x30] sm:$0xff]
    %v84 = vld [vmem:[#allocation2 + $0x38] sm:$0xff]
    %v85 = vld [vmem:[#allocation2 + $0x40] sm:$0xff]
    %v86 = vld [vmem:[#allocation2 + $0x48] sm:$0xff]
    %v87 = vld [vmem:[#allocation2 + $0x50] sm:$0xff]
    %v88 = vld [vmem:[#allocation2 + $0x58] sm:$0xff]
    %v89 = vld [vmem:[#allocation2 + $0x60] sm:$0xff]
    %v90 = vld [vmem:[#allocation2 + $0x68] sm:$0xff]
    %v91 = vld [vmem:[#allocation2 + $0x70] sm:$0xff]
    %v92 = vld [vmem:[#allocation2 + $0x78] sm:$0xff]
    %v93 = vld [vmem:[#allocation2 + $0x80] sm:$0xff]
    %v94 = vld [vmem:[#allocation2 + $0x88] sm:$0xff]
    %v95 = vld [vmem:[#allocation2 + $0x90] sm:$0xff]
    %v96 = vld [vmem:[#allocation2 + $0x98] sm:$0xff]
    %v97 = vld [vmem:[#allocation2 + $0xa0] sm:$0xff]
    %v98 = vld [vmem:[#allocation2 + $0xa8] sm:$0xff]
    %v99 = vld [vmem:[#allocation2 + $0xb0] sm:$0xff]
    %v100 = vld [vmem:[#allocation2 + $0xb8] sm:$0xff]
    %v101 = vld [vmem:[%s4] sm:$0x3]
    %v103 = vlaneseq
    %v104 = vshrl.u32 %v103, 7
    %v105 = vsub.s32 0, %v104
    %v106 = vrot.slane %v101, %v105
    %v107 = vlaneseq
    %v108 = vshrl.u32 %v107, 7
    %v109 = vsub.s32 1, %v108
    %v110 = vrot.slane %v101, %v109
    %v137 = vunpack.c.l.b16 %v77
    %v138 = vunpack.c.h.b16 %v77
    %v139 = vunpack.c.l.b16 %v78
    %v140 = vunpack.c.h.b16 %v78
    %v141 = vunpack.c.l.b16 %v79
    %v142 = vunpack.c.h.b16 %v79
    %v143 = vunpack.c.l.b16 %v80
    %v144 = vunpack.c.h.b16 %v80
    %v145 = vunpack.c.l.b16 %v81
    %v146 = vunpack.c.h.b16 %v81
    %v147 = vunpack.c.l.b16 %v82
    %v148 = vunpack.c.h.b16 %v82
    %v149 = vunpack.c.l.b16 %v83
    %v150 = vunpack.c.h.b16 %v83
    %v151 = vunpack.c.l.b16 %v84
    %v152 = vunpack.c.h.b16 %v84
    %v153 = vunpack.c.l.b16 %v85
    %v154 = vunpack.c.h.b16 %v85
    %v155 = vunpack.c.l.b16 %v86
    %v156 = vunpack.c.h.b16 %v86
    %v157 = vunpack.c.l.b16 %v87
    %v158 = vunpack.c.h.b16 %v87
    %v159 = vunpack.c.l.b16 %v88
    %v160 = vunpack.c.h.b16 %v88
    %v161 = vunpack.c.l.b16 %v89
    %v162 = vunpack.c.h.b16 %v89
    %v163 = vunpack.c.l.b16 %v90
    %v164 = vunpack.c.h.b16 %v90
    %v165 = vunpack.c.l.b16 %v91
    %v166 = vunpack.c.h.b16 %v91
    %v167 = vunpack.c.l.b16 %v92
    %v168 = vunpack.c.h.b16 %v92
    %v169 = vunpack.c.l.b16 %v93
    %v170 = vunpack.c.h.b16 %v93
    %v171 = vunpack.c.l.b16 %v94
    %v172 = vunpack.c.h.b16 %v94
    %v173 = vunpack.c.l.b16 %v95
    %v174 = vunpack.c.h.b16 %v95
    %v175 = vunpack.c.l.b16 %v96
    %v176 = vunpack.c.h.b16 %v96
    %v177 = vunpack.c.l.b16 %v97
    %v178 = vunpack.c.h.b16 %v97
    %v179 = vunpack.c.l.b16 %v98
    %v180 = vunpack.c.h.b16 %v98
    %v181 = vunpack.c.l.b16 %v99
    %v182 = vunpack.c.h.b16 %v99
    %v183 = vunpack.c.l.b16 %v100
    %v184 = vunpack.c.h.b16 %v100
    %v185 = vpack.c.b16 %v139, %v137
    %v186 = vpack.c.b16 %v140, %v138
    %v187 = vpack.c.b16 %v143, %v141
    %v188 = vpack.c.b16 %v144, %v142
    %v189 = vpack.c.b16 %v147, %v145
    %v190 = vpack.c.b16 %v148, %v146
    %v191 = vpack.c.b16 %v151, %v149
    %v192 = vpack.c.b16 %v152, %v150
    %v193 = vpack.c.b16 %v155, %v153
    %v194 = vpack.c.b16 %v156, %v154
    %v195 = vpack.c.b16 %v159, %v157
    %v196 = vpack.c.b16 %v160, %v158
    %v197 = vpack.c.b16 %v163, %v161
    %v198 = vpack.c.b16 %v164, %v162
    %v199 = vpack.c.b16 %v167, %v165
    %v200 = vpack.c.b16 %v168, %v166
    %v201 = vpack.c.b16 %v171, %v169
    %v202 = vpack.c.b16 %v172, %v170
    %v203 = vpack.c.b16 %v175, %v173
    %v204 = vpack.c.b16 %v176, %v174
    %v205 = vpack.c.b16 %v179, %v177
    %v206 = vpack.c.b16 %v180, %v178
    %v207 = vpack.c.b16 %v183, %v181
    %v208 = vpack.c.b16 %v184, %v182
    %vm233 = vcmask 523264
    %v235 = vsel %vm233, %v76, 0
    %237 = vmatprep.subr.bf16.mxu0 %v186
    %238 = vmatpush1.bf16.msra.mxu0 %v185
    %239 = vmatprep.subr.bf16.mxu0 %v188
    %240 = vmatpush1.bf16.msra.mxu0 %v187
    %241 = vmatprep.subr.bf16.mxu0 %v190
    %242 = vmatpush1.bf16.msra.mxu0 %v189
    %243 = vmatprep.subr.bf16.mxu0 %v192
    %244 = vmatpush1.bf16.msra.mxu0 %v191
    %245 = vmatprep.subr.bf16.mxu0 %v194
    %246 = vmatpush1.bf16.msra.mxu0 %v193
    %247 = vmatprep.subr.bf16.mxu0 %v196
    %248 = vmatpush1.bf16.msra.mxu0 %v195
    %249 = vmatprep.subr.bf16.mxu0 %v198
    %250 = vmatpush1.bf16.msra.mxu0 %v197
    %251 = vmatprep.subr.bf16.mxu0 %v200
    %252 = vmatpush1.bf16.msra.mxu0 %v199
    %253 = vmatprep.subr.bf16.mxu0 %v202
    %254 = vmatpush1.bf16.msra.mxu0 %v201
    %255 = vmatprep.subr.bf16.mxu0 %v204
    %256 = vmatpush1.bf16.msra.mxu0 %v203
    %257 = vmatprep.subr.bf16.mxu0 %v206
    %258 = vmatpush1.bf16.msra.mxu0 %v205
    %259 = vmatprep.subr.bf16.mxu0 %v208
    %260 = vmatpush1.bf16.msra.mxu0 %v207
    %261 = vmatprep.subr.bf16.mxu0 0
    %262 = vmatpush1.bf16.msra.mxu0 0
    %263 = vmatprep.subr.bf16.mxu0 0
    %264 = vmatpush1.bf16.msra.mxu0 0
    %265 = vmatprep.subr.bf16.mxu0 0
    %266 = vmatpush1.bf16.msra.mxu0 0
    %267 = vmatprep.subr.bf16.mxu0 0
    %268 = vmatpush1.bf16.msra.mxu0 0
    %269 = vmatprep.mubr.bf16.mxu0 %v235
    %270 = vmatmul.mubr.bf16.gmra.mrb[0].mxu0 %v75
    %v271 = vpop.f32.mrb[0].mxu0
    %v272 = vadd.f32 %v106, %v271
    %v273 = vpop.f32.mrb[0].mxu0
    %v274 = vadd.f32 %v110, %v273
    %v275 = vpop.f32.mrb[0].mxu0
    %v276 = vpop.f32.mrb[0].mxu0
    %277 = vdwg.mxu0
    %v278 = vmax.f32 %v272, 0.0
    %v279 = vmax.f32 %v274, 0.0
    %v280 = vpack.c.bf16 %v278, %v278
    %v281 = vpack.c.bf16 %v279, %v279
    %v282 = vld [vmem:[#allocation5] sm:$0xf]
    %v283 = vld [vmem:[#allocation5 + $0x4] sm:$0xf]
    %v284 = vld [vmem:[#allocation5 + $0x8] sm:$0xf]
    %v285 = vld [vmem:[#allocation5 + $0xc] sm:$0xf]
    %v286 = vld [vmem:[#allocation5 + $0x10] sm:$0xf]
    %v287 = vld [vmem:[#allocation5 + $0x14] sm:$0xf]
    %v288 = vld [vmem:[#allocation5 + $0x18] sm:$0xf]
    %v289 = vld [vmem:[#allocation5 + $0x1c] sm:$0xf]
    %v290 = vld [vmem:[#allocation5 + $0x20] sm:$0xf]
    %v291 = vld [vmem:[#allocation5 + $0x24] sm:$0xf]
    %v292 = vld [vmem:[#allocation5 + $0x28] sm:$0xf]
    %v293 = vld [vmem:[#allocation5 + $0x2c] sm:$0xf]
    %v294 = vld [vmem:[#allocation5 + $0x30] sm:$0xf]
    %v295 = vld [vmem:[#allocation5 + $0x34] sm:$0xf]
    %v296 = vld [vmem:[#allocation5 + $0x38] sm:$0xf]
    %v297 = vld [vmem:[#allocation5 + $0x3c] sm:$0xf]
    %v298 = vld [vmem:[#allocation5 + $0x40] sm:$0xf]
    %v299 = vld [vmem:[#allocation5 + $0x44] sm:$0xf]
    %v300 = vld [vmem:[#allocation5 + $0x48] sm:$0xf]
    %v301 = vld [vmem:[#allocation5 + $0x4c] sm:$0xf]
    %v302 = vld [vmem:[#allocation5 + $0x50] sm:$0xf]
    %v303 = vld [vmem:[#allocation5 + $0x54] sm:$0xf]
    %v304 = vld [vmem:[#allocation5 + $0x58] sm:$0xf]
    %v305 = vld [vmem:[#allocation5 + $0x5c] sm:$0xf]
    %v306 = vld [vmem:[#allocation5 + $0x60] sm:$0xf]
    %v307 = vld [vmem:[#allocation5 + $0x64] sm:$0xf]
    %v308 = vld [vmem:[#allocation5 + $0x68] sm:$0xf]
    %v309 = vld [vmem:[#allocation5 + $0x6c] sm:$0xf]
    %v310 = vld [vmem:[#allocation5 + $0x70] sm:$0xf]
    %v311 = vld [vmem:[#allocation5 + $0x74] sm:$0xf]
    %v312 = vld [vmem:[#allocation5 + $0x78] sm:$0xf]
    %v313 = vld [vmem:[#allocation5 + $0x7c] sm:$0xf]
    %s314 = scalar_lea.vmem %s4, 2
    %v315 = vld [vmem:[%s314] sm:$0x3]
    %v317 = vlaneseq
    %v318 = vshrl.u32 %v317, 7
    %v319 = vsub.s32 0, %v318
    %v320 = vrot.slane %v315, %v319
    %v354 = vunpack.c.l.b16 %v282
    %v355 = vunpack.c.l.b16 %v283
    %v356 = vunpack.c.l.b16 %v284
    %v357 = vunpack.c.l.b16 %v285
    %v358 = vunpack.c.l.b16 %v286
    %v359 = vunpack.c.l.b16 %v287
    %v360 = vunpack.c.l.b16 %v288
    %v361 = vunpack.c.l.b16 %v289
    %v362 = vunpack.c.l.b16 %v290
    %v363 = vunpack.c.l.b16 %v291
    %v364 = vunpack.c.l.b16 %v292
    %v365 = vunpack.c.l.b16 %v293
    %v366 = vunpack.c.l.b16 %v294
    %v367 = vunpack.c.l.b16 %v295
    %v368 = vunpack.c.l.b16 %v296
    %v369 = vunpack.c.l.b16 %v297
    %v370 = vunpack.c.l.b16 %v298
    %v371 = vunpack.c.l.b16 %v299
    %v372 = vunpack.c.l.b16 %v300
    %v373 = vunpack.c.l.b16 %v301
    %v374 = vunpack.c.l.b16 %v302
    %v375 = vunpack.c.l.b16 %v303
    %v376 = vunpack.c.l.b16 %v304
    %v377 = vunpack.c.l.b16 %v305
    %v378 = vunpack.c.l.b16 %v306
    %v379 = vunpack.c.l.b16 %v307
    %v380 = vunpack.c.l.b16 %v308
    %v381 = vunpack.c.l.b16 %v309
    %v382 = vunpack.c.l.b16 %v310
    %v383 = vunpack.c.l.b16 %v311
    %v384 = vunpack.c.l.b16 %v312
    %v385 = vunpack.c.l.b16 %v313
    %v386 = vpack.c.b16 %v355, %v354
    %v387 = vpack.c.b16 %v357, %v356
    %v388 = vpack.c.b16 %v359, %v358
    %v389 = vpack.c.b16 %v361, %v360
    %v390 = vpack.c.b16 %v363, %v362
    %v391 = vpack.c.b16 %v365, %v364
    %v392 = vpack.c.b16 %v367, %v366
    %v393 = vpack.c.b16 %v369, %v368
    %v394 = vpack.c.b16 %v371, %v370
    %v395 = vpack.c.b16 %v373, %v372
    %v396 = vpack.c.b16 %v375, %v374
    %v397 = vpack.c.b16 %v377, %v376
    %v398 = vpack.c.b16 %v379, %v378
    %v399 = vpack.c.b16 %v381, %v380
    %v400 = vpack.c.b16 %v383, %v382
    %v401 = vpack.c.b16 %v385, %v384
    %418 = vmatprep.subr.bf16.mxu0 0
    %419 = vmatpush1.bf16.msra.mxu0 %v386
    %420 = vmatprep.subr.bf16.mxu0 0
    %421 = vmatpush1.bf16.msra.mxu0 %v387
    %422 = vmatprep.subr.bf16.mxu0 0
    %423 = vmatpush1.bf16.msra.mxu0 %v388
    %424 = vmatprep.subr.bf16.mxu0 0
    %425 = vmatpush1.bf16.msra.mxu0 %v389
    %426 = vmatprep.subr.bf16.mxu0 0
    %427 = vmatpush1.bf16.msra.mxu0 %v390
    %428 = vmatprep.subr.bf16.mxu0 0
    %429 = vmatpush1.bf16.msra.mxu0 %v391
    %430 = vmatprep.subr.bf16.mxu0 0
    %431 = vmatpush1.bf16.msra.mxu0 %v392
    %432 = vmatprep.subr.bf16.mxu0 0
    %433 = vmatpush1.bf16.msra.mxu0 %v393
    %434 = vmatprep.subr.bf16.mxu0 0
    %435 = vmatpush1.bf16.msra.mxu0 %v394
    %436 = vmatprep.subr.bf16.mxu0 0
    %437 = vmatpush1.bf16.msra.mxu0 %v395
    %438 = vmatprep.subr.bf16.mxu0 0
    %439 = vmatpush1.bf16.msra.mxu0 %v396
    %440 = vmatprep.subr.bf16.mxu0 0
    %441 = vmatpush1.bf16.msra.mxu0 %v397
    %442 = vmatprep.subr.bf16.mxu0 0
    %443 = vmatpush1.bf16.msra.mxu0 %v398
    %444 = vmatprep.subr.bf16.mxu0 0
    %445 = vmatpush1.bf16.msra.mxu0 %v399
    %446 = vmatprep.subr.bf16.mxu0 0
    %447 = vmatpush1.bf16.msra.mxu0 %v400
    %448 = vmatprep.subr.bf16.mxu0 0
    %449 = vmatpush1.bf16.msra.mxu0 %v401
    %450 = vmatprep.mubr.bf16.mxu0 %v281
    %451 = vmatmul.mubr.bf16.gmra.mrb[0].mxu0 %v280
    %v452 = vpop.f32.mrb[0].mxu0
    %v453 = vadd.f32 %v320, %v452
    %v454 = vpop.f32.mrb[0].mxu0
    %v455 = vpop.f32.mrb[0].mxu0
    %v456 = vpop.f32.mrb[0].mxu0
    %457 = vdwg.mxu0
    %v458 = vmax.f32 %v453, 0.0
    %v459 = vpack.c.bf16 %v458, %v458
    %v460 = vld [vmem:[#allocation7] sm:$0xf]
    %v461 = vld [vmem:[#allocation7 + $0x4] sm:$0xf]
    %v462 = vld [vmem:[#allocation7 + $0x8] sm:$0xf]
    %v463 = vld [vmem:[#allocation7 + $0xc] sm:$0xf]
    %v464 = vld [vmem:[#allocation7 + $0x10] sm:$0xf]
    %v465 = vld [vmem:[#allocation7 + $0x14] sm:$0xf]
    %v466 = vld [vmem:[#allocation7 + $0x18] sm:$0xf]
    %v467 = vld [vmem:[#allocation7 + $0x1c] sm:$0xf]
    %v468 = vld [vmem:[#allocation7 + $0x20] sm:$0xf]
    %v469 = vld [vmem:[#allocation7 + $0x24] sm:$0xf]
    %v470 = vld [vmem:[#allocation7 + $0x28] sm:$0xf]
    %v471 = vld [vmem:[#allocation7 + $0x2c] sm:$0xf]
    %v472 = vld [vmem:[#allocation7 + $0x30] sm:$0xf]
    %v473 = vld [vmem:[#allocation7 + $0x34] sm:$0xf]
    %v474 = vld [vmem:[#allocation7 + $0x38] sm:$0xf]
    %v475 = vld [vmem:[#allocation7 + $0x3c] sm:$0xf]
    %s476 = scalar_lea.vmem %s4, 4
    %v477 = vld [vmem:[%s476] sm:$0x3]
    %v479 = vlaneseq
    %v480 = vshrl.u32 %v479, 7
    %v481 = vsub.s32 0, %v480
    %v482 = vrot.slane %v477, %v481
    %v500 = vunpack.c.l.b16 %v460
    %v501 = vunpack.c.l.b16 %v461
    %v502 = vunpack.c.l.b16 %v462
    %v503 = vunpack.c.l.b16 %v463
    %v504 = vunpack.c.l.b16 %v464
    %v505 = vunpack.c.l.b16 %v465
    %v506 = vunpack.c.l.b16 %v466
    %v507 = vunpack.c.l.b16 %v467
    %v508 = vunpack.c.l.b16 %v468
    %v509 = vunpack.c.l.b16 %v469
    %v510 = vunpack.c.l.b16 %v470
    %v511 = vunpack.c.l.b16 %v471
    %v512 = vunpack.c.l.b16 %v472
    %v513 = vunpack.c.l.b16 %v473
    %v514 = vunpack.c.l.b16 %v474
    %v515 = vunpack.c.l.b16 %v475
    %v516 = vpack.c.b16 %v501, %v500
    %v517 = vpack.c.b16 %v503, %v502
    %v518 = vpack.c.b16 %v505, %v504
    %v519 = vpack.c.b16 %v507, %v506
    %v520 = vpack.c.b16 %v509, %v508
    %v521 = vpack.c.b16 %v511, %v510
    %v522 = vpack.c.b16 %v513, %v512
    %v523 = vpack.c.b16 %v515, %v514
    %532 = vmatprep.subr.bf16.mxu0 0
    %533 = vmatpush1.bf16.msra.mxu0 %v516
    %534 = vmatprep.subr.bf16.mxu0 0
    %535 = vmatpush1.bf16.msra.mxu0 %v517
    %536 = vmatprep.subr.bf16.mxu0 0
    %537 = vmatpush1.bf16.msra.mxu0 %v518
    %538 = vmatprep.subr.bf16.mxu0 0
    %539 = vmatpush1.bf16.msra.mxu0 %v519
    %540 = vmatprep.subr.bf16.mxu0 0
    %541 = vmatpush1.bf16.msra.mxu0 %v520
    %542 = vmatprep.subr.bf16.mxu0 0
    %543 = vmatpush1.bf16.msra.mxu0 %v521
    %544 = vmatprep.subr.bf16.mxu0 0
    %545 = vmatpush1.bf16.msra.mxu0 %v522
    %546 = vmatprep.subr.bf16.mxu0 0
    %547 = vmatpush1.bf16.msra.mxu0 %v523
    %548 = vmatprep.subr.bf16.mxu0 0
    %549 = vmatpush1.bf16.msra.mxu0 0
    %550 = vmatprep.subr.bf16.mxu0 0
    %551 = vmatpush1.bf16.msra.mxu0 0
    %552 = vmatprep.subr.bf16.mxu0 0
    %553 = vmatpush1.bf16.msra.mxu0 0
    %554 = vmatprep.subr.bf16.mxu0 0
    %555 = vmatpush1.bf16.msra.mxu0 0
    %556 = vmatprep.subr.bf16.mxu0 0
    %557 = vmatpush1.bf16.msra.mxu0 0
    %558 = vmatprep.subr.bf16.mxu0 0
    %559 = vmatpush1.bf16.msra.mxu0 0
    %560 = vmatprep.subr.bf16.mxu0 0
    %561 = vmatpush1.bf16.msra.mxu0 0
    %562 = vmatprep.subr.bf16.mxu0 0
    %563 = vmatpush1.bf16.msra.mxu0 0
    %564 = vmatprep.mubr.bf16.mxu0 0
    %565 = vmatmul.mubr.bf16.gmra.mrb[0].mxu0 %v459
    %v566 = vpop.f32.mrb[0].mxu0
    %v567 = vadd.f32 %v482, %v566
    %v568 = vpop.f32.mrb[0].mxu0
    %v569 = vpop.f32.mrb[0].mxu0
    %v570 = vpop.f32.mrb[0].mxu0
    %571 = vdwg.mxu0
    %v572 = vmax.f32 %v567, 0.0
    %v573 = vpack.c.bf16 %v572, %v572
    %s574 = scalar_lea.vmem [#allocation7], 64
    %v575 = vld [vmem:[%s574] sm:$0xf]
    %v576 = vld [vmem:[%s574 + $0x4] sm:$0xf]
    %v577 = vld [vmem:[%s574 + $0x8] sm:$0xf]
    %v578 = vld [vmem:[%s574 + $0xc] sm:$0xf]
    %v579 = vld [vmem:[%s574 + $0x10] sm:$0xf]
    %v580 = vld [vmem:[%s574 + $0x14] sm:$0xf]
    %v581 = vld [vmem:[%s574 + $0x18] sm:$0xf]
    %v582 = vld [vmem:[%s574 + $0x1c] sm:$0xf]
    %v583 = vld [vmem:[%s574 + $0x20] sm:$0xf]
    %v584 = vld [vmem:[%s574 + $0x24] sm:$0xf]
    %v585 = vld [vmem:[%s574 + $0x28] sm:$0xf]
    %v586 = vld [vmem:[%s574 + $0x2c] sm:$0xf]
    %v587 = vld [vmem:[%s574 + $0x30] sm:$0xf]
    %v588 = vld [vmem:[%s574 + $0x34] sm:$0xf]
    %v589 = vld [vmem:[%s574 + $0x38] sm:$0xf]
    %v590 = vld [vmem:[%s574 + $0x3c] sm:$0xf]
    %s591 = scalar_lea.vmem %s4, 6
    %v592 = vld [vmem:[%s591] sm:$0x3]
    %v594 = vlaneseq
    %v595 = vshrl.u32 %v594, 7
    %v596 = vsub.s32 0, %v595
    %v597 = vrot.slane %v592, %v596
    %v615 = vunpack.c.l.b16 %v575
    %v616 = vunpack.c.l.b16 %v576
    %v617 = vunpack.c.l.b16 %v577
    %v618 = vunpack.c.l.b16 %v578
    %v619 = vunpack.c.l.b16 %v579
    %v620 = vunpack.c.l.b16 %v580
    %v621 = vunpack.c.l.b16 %v581
    %v622 = vunpack.c.l.b16 %v582
    %v623 = vunpack.c.l.b16 %v583
    %v624 = vunpack.c.l.b16 %v584
    %v625 = vunpack.c.l.b16 %v585
    %v626 = vunpack.c.l.b16 %v586
    %v627 = vunpack.c.l.b16 %v587
    %v628 = vunpack.c.l.b16 %v588
    %v629 = vunpack.c.l.b16 %v589
    %v630 = vunpack.c.l.b16 %v590
    %v631 = vpack.c.b16 %v616, %v615
    %v632 = vpack.c.b16 %v618, %v617
    %v633 = vpack.c.b16 %v620, %v619
    %v634 = vpack.c.b16 %v622, %v621
    %v635 = vpack.c.b16 %v624, %v623
    %v636 = vpack.c.b16 %v626, %v625
    %v637 = vpack.c.b16 %v628, %v627
    %v638 = vpack.c.b16 %v630, %v629
    %647 = vmatprep.subr.bf16.mxu0 0
    %648 = vmatpush1.bf16.msra.mxu0 %v631
    %649 = vmatprep.subr.bf16.mxu0 0
    %650 = vmatpush1.bf16.msra.mxu0 %v632
    %651 = vmatprep.subr.bf16.mxu0 0
    %652 = vmatpush1.bf16.msra.mxu0 %v633
    %653 = vmatprep.subr.bf16.mxu0 0
    %654 = vmatpush1.bf16.msra.mxu0 %v634
    %655 = vmatprep.subr.bf16.mxu0 0
    %656 = vmatpush1.bf16.msra.mxu0 %v635
    %657 = vmatprep.subr.bf16.mxu0 0
    %658 = vmatpush1.bf16.msra.mxu0 %v636
    %659 = vmatprep.subr.bf16.mxu0 0
    %660 = vmatpush1.bf16.msra.mxu0 %v637
    %661 = vmatprep.subr.bf16.mxu0 0
    %662 = vmatpush1.bf16.msra.mxu0 %v638
    %663 = vmatprep.subr.bf16.mxu0 0
    %664 = vmatpush1.bf16.msra.mxu0 0
    %665 = vmatprep.subr.bf16.mxu0 0
    %666 = vmatpush1.bf16.msra.mxu0 0
    %667 = vmatprep.subr.bf16.mxu0 0
    %668 = vmatpush1.bf16.msra.mxu0 0
    %669 = vmatprep.subr.bf16.mxu0 0
    %670 = vmatpush1.bf16.msra.mxu0 0
    %671 = vmatprep.subr.bf16.mxu0 0
    %672 = vmatpush1.bf16.msra.mxu0 0
    %673 = vmatprep.subr.bf16.mxu0 0
    %674 = vmatpush1.bf16.msra.mxu0 0
    %675 = vmatprep.subr.bf16.mxu0 0
    %676 = vmatpush1.bf16.msra.mxu0 0
    %677 = vmatprep.subr.bf16.mxu0 0
    %678 = vmatpush1.bf16.msra.mxu0 0
    %679 = vmatprep.mubr.bf16.mxu0 0
    %680 = vmatmul.mubr.bf16.gmra.mrb[0].mxu0 %v573
    %v681 = vpop.f32.mrb[0].mxu0
    %v682 = vadd.f32 %v597, %v681
    %v683 = vpop.f32.mrb[0].mxu0
    %v684 = vpop.f32.mrb[0].mxu0
    %v685 = vpop.f32.mrb[0].mxu0
    %686 = vdwg.mxu0
    %v687 = vmax.f32 %v682, 0.0
    %v688 = vpack.c.bf16 %v687, %v687
    %s689 = scalar_lea.vmem [#allocation7], 128
    %v690 = vld [vmem:[%s689] sm:$0xf]
    %v691 = vld [vmem:[%s689 + $0x4] sm:$0xf]
    %v692 = vld [vmem:[%s689 + $0x8] sm:$0xf]
    %v693 = vld [vmem:[%s689 + $0xc] sm:$0xf]
    %v694 = vld [vmem:[%s689 + $0x10] sm:$0xf]
    %v695 = vld [vmem:[%s689 + $0x14] sm:$0xf]
    %v696 = vld [vmem:[%s689 + $0x18] sm:$0xf]
    %v697 = vld [vmem:[%s689 + $0x1c] sm:$0xf]
    %v698 = vld [vmem:[%s689 + $0x20] sm:$0xf]
    %v699 = vld [vmem:[%s689 + $0x24] sm:$0xf]
    %v700 = vld [vmem:[%s689 + $0x28] sm:$0xf]
    %v701 = vld [vmem:[%s689 + $0x2c] sm:$0xf]
    %v702 = vld [vmem:[%s689 + $0x30] sm:$0xf]
    %v703 = vld [vmem:[%s689 + $0x34] sm:$0xf]
    %v704 = vld [vmem:[%s689 + $0x38] sm:$0xf]
    %v705 = vld [vmem:[%s689 + $0x3c] sm:$0xf]
    %s706 = scalar_lea.vmem %s4, 8
    %v707 = vld [vmem:[%s706] sm:$0x3]
    %v709 = vlaneseq
    %v710 = vshrl.u32 %v709, 7
    %v711 = vsub.s32 0, %v710
    %v712 = vrot.slane %v707, %v711
    %v730 = vunpack.c.l.b16 %v690
    %v731 = vunpack.c.l.b16 %v691
    %v732 = vunpack.c.l.b16 %v692
    %v733 = vunpack.c.l.b16 %v693
    %v734 = vunpack.c.l.b16 %v694
    %v735 = vunpack.c.l.b16 %v695
    %v736 = vunpack.c.l.b16 %v696
    %v737 = vunpack.c.l.b16 %v697
    %v738 = vunpack.c.l.b16 %v698
    %v739 = vunpack.c.l.b16 %v699
    %v740 = vunpack.c.l.b16 %v700
    %v741 = vunpack.c.l.b16 %v701
    %v742 = vunpack.c.l.b16 %v702
    %v743 = vunpack.c.l.b16 %v703
    %v744 = vunpack.c.l.b16 %v704
    %v745 = vunpack.c.l.b16 %v705
    %v746 = vpack.c.b16 %v731, %v730
    %v747 = vpack.c.b16 %v733, %v732
    %v748 = vpack.c.b16 %v735, %v734
    %v749 = vpack.c.b16 %v737, %v736
    %v750 = vpack.c.b16 %v739, %v738
    %v751 = vpack.c.b16 %v741, %v740
    %v752 = vpack.c.b16 %v743, %v742
    %v753 = vpack.c.b16 %v745, %v744
    %762 = vmatprep.subr.bf16.mxu0 0
    %763 = vmatpush1.bf16.msra.mxu0 %v746
    %764 = vmatprep.subr.bf16.mxu0 0
    %765 = vmatpush1.bf16.msra.mxu0 %v747
    %766 = vmatprep.subr.bf16.mxu0 0
    %767 = vmatpush1.bf16.msra.mxu0 %v748
    %768 = vmatprep.subr.bf16.mxu0 0
    %769 = vmatpush1.bf16.msra.mxu0 %v749
    %770 = vmatprep.subr.bf16.mxu0 0
    %771 = vmatpush1.bf16.msra.mxu0 %v750
    %772 = vmatprep.subr.bf16.mxu0 0
    %773 = vmatpush1.bf16.msra.mxu0 %v751
    %774 = vmatprep.subr.bf16.mxu0 0
    %775 = vmatpush1.bf16.msra.mxu0 %v752
    %776 = vmatprep.subr.bf16.mxu0 0
    %777 = vmatpush1.bf16.msra.mxu0 %v753
    %778 = vmatprep.subr.bf16.mxu0 0
    %779 = vmatpush1.bf16.msra.mxu0 0
    %780 = vmatprep.subr.bf16.mxu0 0
    %781 = vmatpush1.bf16.msra.mxu0 0
    %782 = vmatprep.subr.bf16.mxu0 0
    %783 = vmatpush1.bf16.msra.mxu0 0
    %784 = vmatprep.subr.bf16.mxu0 0
    %785 = vmatpush1.bf16.msra.mxu0 0
    %786 = vmatprep.subr.bf16.mxu0 0
    %787 = vmatpush1.bf16.msra.mxu0 0
    %788 = vmatprep.subr.bf16.mxu0 0
    %789 = vmatpush1.bf16.msra.mxu0 0
    %790 = vmatprep.subr.bf16.mxu0 0
    %791 = vmatpush1.bf16.msra.mxu0 0
    %792 = vmatprep.subr.bf16.mxu0 0
    %793 = vmatpush1.bf16.msra.mxu0 0
    %794 = vmatprep.mubr.bf16.mxu0 0
    %795 = vmatmul.mubr.bf16.gmra.mrb[0].mxu0 %v688
    %v796 = vpop.f32.mrb[0].mxu0
    %v797 = vadd.f32 %v712, %v796
    %v798 = vpop.f32.mrb[0].mxu0
    %v799 = vpop.f32.mrb[0].mxu0
    %v800 = vpop.f32.mrb[0].mxu0
    %801 = vdwg.mxu0
    %v802 = vmax.f32 %v797, 0.0
    %v803 = vpack.c.bf16 %v802, %v802
    %s804 = scalar_lea.vmem [#allocation7], 192
    %v805 = vld [vmem:[%s804] sm:$0xf]
    %v806 = vld [vmem:[%s804 + $0x4] sm:$0xf]
    %v807 = vld [vmem:[%s804 + $0x8] sm:$0xf]
    %v808 = vld [vmem:[%s804 + $0xc] sm:$0xf]
    %v809 = vld [vmem:[%s804 + $0x10] sm:$0xf]
    %v810 = vld [vmem:[%s804 + $0x14] sm:$0xf]
    %v811 = vld [vmem:[%s804 + $0x18] sm:$0xf]
    %v812 = vld [vmem:[%s804 + $0x1c] sm:$0xf]
    %v813 = vld [vmem:[%s804 + $0x20] sm:$0xf]
    %v814 = vld [vmem:[%s804 + $0x24] sm:$0xf]
    %v815 = vld [vmem:[%s804 + $0x28] sm:$0xf]
    %v816 = vld [vmem:[%s804 + $0x2c] sm:$0xf]
    %v817 = vld [vmem:[%s804 + $0x30] sm:$0xf]
    %v818 = vld [vmem:[%s804 + $0x34] sm:$0xf]
    %v819 = vld [vmem:[%s804 + $0x38] sm:$0xf]
    %v820 = vld [vmem:[%s804 + $0x3c] sm:$0xf]
    %s821 = scalar_lea.vmem %s4, 10
    %v822 = vld [vmem:[%s821] sm:$0x3]
    %v824 = vlaneseq
    %v825 = vshrl.u32 %v824, 7
    %v826 = vsub.s32 0, %v825
    %v827 = vrot.slane %v822, %v826
    %v845 = vunpack.c.l.b16 %v805
    %v846 = vunpack.c.l.b16 %v806
    %v847 = vunpack.c.l.b16 %v807
    %v848 = vunpack.c.l.b16 %v808
    %v849 = vunpack.c.l.b16 %v809
    %v850 = vunpack.c.l.b16 %v810
    %v851 = vunpack.c.l.b16 %v811
    %v852 = vunpack.c.l.b16 %v812
    %v853 = vunpack.c.l.b16 %v813
    %v854 = vunpack.c.l.b16 %v814
    %v855 = vunpack.c.l.b16 %v815
    %v856 = vunpack.c.l.b16 %v816
    %v857 = vunpack.c.l.b16 %v817
    %v858 = vunpack.c.l.b16 %v818
    %v859 = vunpack.c.l.b16 %v819
    %v860 = vunpack.c.l.b16 %v820
    %v861 = vpack.c.b16 %v846, %v845
    %v862 = vpack.c.b16 %v848, %v847
    %v863 = vpack.c.b16 %v850, %v849
    %v864 = vpack.c.b16 %v852, %v851
    %v865 = vpack.c.b16 %v854, %v853
    %v866 = vpack.c.b16 %v856, %v855
    %v867 = vpack.c.b16 %v858, %v857
    %v868 = vpack.c.b16 %v860, %v859
    %877 = vmatprep.subr.bf16.mxu0 0
    %878 = vmatpush1.bf16.msra.mxu0 %v861
    %879 = vmatprep.subr.bf16.mxu0 0
    %880 = vmatpush1.bf16.msra.mxu0 %v862
    %881 = vmatprep.subr.bf16.mxu0 0
    %882 = vmatpush1.bf16.msra.mxu0 %v863
    %883 = vmatprep.subr.bf16.mxu0 0
    %884 = vmatpush1.bf16.msra.mxu0 %v864
    %885 = vmatprep.subr.bf16.mxu0 0
    %886 = vmatpush1.bf16.msra.mxu0 %v865
    %887 = vmatprep.subr.bf16.mxu0 0
    %888 = vmatpush1.bf16.msra.mxu0 %v866
    %889 = vmatprep.subr.bf16.mxu0 0
    %890 = vmatpush1.bf16.msra.mxu0 %v867
    %891 = vmatprep.subr.bf16.mxu0 0
    %892 = vmatpush1.bf16.msra.mxu0 %v868
    %893 = vmatprep.subr.bf16.mxu0 0
    %894 = vmatpush1.bf16.msra.mxu0 0
    %895 = vmatprep.subr.bf16.mxu0 0
    %896 = vmatpush1.bf16.msra.mxu0 0
    %897 = vmatprep.subr.bf16.mxu0 0
    %898 = vmatpush1.bf16.msra.mxu0 0
    %899 = vmatprep.subr.bf16.mxu0 0
    %900 = vmatpush1.bf16.msra.mxu0 0
    %901 = vmatprep.subr.bf16.mxu0 0
    %902 = vmatpush1.bf16.msra.mxu0 0
    %903 = vmatprep.subr.bf16.mxu0 0
    %904 = vmatpush1.bf16.msra.mxu0 0
    %905 = vmatprep.subr.bf16.mxu0 0
    %906 = vmatpush1.bf16.msra.mxu0 0
    %907 = vmatprep.subr.bf16.mxu0 0
    %908 = vmatpush1.bf16.msra.mxu0 0
    %909 = vmatprep.mubr.bf16.mxu0 0
    %910 = vmatmul.mubr.bf16.gmra.mrb[0].mxu0 %v803
    %v911 = vpop.f32.mrb[0].mxu0
    %v912 = vadd.f32 %v827, %v911
    %v913 = vpop.f32.mrb[0].mxu0
    %v914 = vpop.f32.mrb[0].mxu0
    %v915 = vpop.f32.mrb[0].mxu0
    %916 = vdwg.mxu0
    %vm917 = vcmask 1041408
    %v918 = vsel %vm917, %v912, -inf
    %919 = vmax.xlane.f32.xlu0 %v918
    %v920 = vpop.xlane.xlu0 %919
    %v921 = vsub.f32 %v912, %v920
    %v922 = vmul.f32 %v921, 1.442695
    %v923 = vpow.pop %v922
    %v924 = vsel %vm917, %v923, 0.0
    %925 = vadd.xlane.f32.xlu0 %v924
    %v926 = vpop.xlane.xlu0 %925
    %v927 = vlog2.pop %v926
    %v928 = vmul.f32 %v927, 0.6931472
    %v929 = vsub.f32 %v921, %v928
    %vm930 = vcmask 9216
    %931 = vst.msk [vmem:[#allocation8] sm:$0x3] %vm930, %v929
    // Predicated region
    $region34: #{network_forward.1} parent=1 // pred_check
      _
    $region35: #{network_forward.1} parent=1 // pred_check_branch
      %933 = sbr.rel (0) target = $region37
    $region36: #{network_forward.1} parent=1 // pred_region
      %s935 = ssub.s32 32, 32
      %936 = vsyncadd [#allocation4], %s935
      %s938 = sshll.u32 [#allocation8], 4
      %s939 = int_to_ptr.vmem [resolvable:$true] %s938
      %941 = dma.vmem_to_hbm [thread:$0]  %s939, 32, %s5, [#allocation4]
    $region37: #{network_forward.1} parent=1 // pred_fallthru
      _
    // Predicated region
    $region38: #{network_forward.1} parent=1 // pred_check
      _
    $region39: #{network_forward.1} parent=1 // pred_check_branch
      %943 = sbr.rel (0) target = $region41
    $region40: #{network_forward.1} parent=1 // pred_region
      %944 = dma.done [#allocation4], 32
    $region41: #{network_forward.1} parent=1 // pred_fallthru
      _
    %945 = vsyncpa [#allocation3], 1
    %946 = vsyncpa [#allocation6], 1
    %947 = vsyncpa [#allocation4], 1

</llo_original>
